<compile_context>
chip_gen: v6e
topology: v6e:2x2x1
jax: 0.10.0
libtpu: 0.0.40
codegen_flags: <defaults>
</compile_context>

<pallas_src>
import functools
import math

import jax
import jax.numpy as jnp
import numpy as np
from jax.experimental import pallas as pl
from jax.experimental.pallas import tpu as pltpu


# ---------------------------------------------------------------------------
# Pure-Python shape math (mirrors AdaptivePadding.get_pad_shape)
# ---------------------------------------------------------------------------
def to_2tuple(x):
    if isinstance(x, (tuple, list)):
        return tuple(x)
    return (x, x)


def get_pad_shape(input_hw, kernel_size, stride, dilation):
    input_h, input_w = input_hw
    kernel_h, kernel_w = kernel_size
    stride_h, stride_w = stride
    dil_h, dil_w = dilation
    output_h = math.ceil(input_h / stride_h)
    output_w = math.ceil(input_w / stride_w)
    pad_h = max((output_h - 1) * stride_h + (kernel_h - 1) * dil_h + 1 - input_h, 0)
    pad_w = max((output_w - 1) * stride_w + (kernel_w - 1) * dil_w + 1 - input_w, 0)
    return pad_h, pad_w


def _cdiv(a, b):
    return -(-a // b)


# ---------------------------------------------------------------------------
# Kernels
# ---------------------------------------------------------------------------
def _pad_rows_flat_kernel(x_ref, o_ref, *, top_elems, in_elems, bottom_elems):
    # Fast path (pad_w == 0): planes are flattened so every load/store is
    # lane-dense and contiguous.  x_ref: (TB, H*W), o_ref: (TB, H_out*W).
    tb = o_ref.shape[0]
    dt = o_ref.dtype
    if top_elems:
        o_ref[:, :top_elems] = jnp.zeros((tb, top_elems), dt)
    o_ref[:, top_elems:top_elems + in_elems] = x_ref[...]
    if bottom_elems:
        o_ref[:, top_elems + in_elems:] = jnp.zeros((tb, bottom_elems), dt)


def _pad_hw_kernel(x_ref, o_ref, *, pad_top, pad_bottom, pad_left, pad_right):
    # General path: input written directly into a static sub-view of the
    # output tile; zeros only on the pad border strips (no concat temp).
    tb, h, w = x_ref.shape
    _, _, w_out = o_ref.shape
    dt = o_ref.dtype
    o_ref[:, pad_top:pad_top + h, pad_left:pad_left + w] = x_ref[...]
    if pad_top:
        o_ref[:, :pad_top, :] = jnp.zeros((tb, pad_top, w_out), dt)
    if pad_bottom:
        o_ref[:, pad_top + h:, :] = jnp.zeros((tb, pad_bottom, w_out), dt)
    if pad_left:
        o_ref[:, pad_top:pad_top + h, :pad_left] = jnp.zeros((tb, h, pad_left), dt)
    if pad_right:
        o_ref[:, pad_top:pad_top + h, pad_left + w:] = jnp.zeros((tb, h, pad_right), dt)


# ---------------------------------------------------------------------------
# Tile-size / VMEM sizing helpers (generation-safe: stays well under the
# 64 MiB physical VMEM of v7x while exceeding v5e's 16 MiB default scope).
# ---------------------------------------------------------------------------
_TILE_BUDGET = 6 << 20        # combined (in+out) tile bytes, single-buffered
_HARD_DB_CAP = 40 << 20       # double-buffered working-set ceiling (v7x-safe)


def _pick_tb_flat(bc, per_plane_bytes):
    # Sublane dim of a 2-D block must be 8-aligned or the full extent.
    if bc <= 8:
        return bc
    cap_vmem = max(8, ((_TILE_BUDGET // max(per_plane_bytes, 1)) // 8) * 8)
    cap_steps = max(8, (_cdiv(bc, 4) // 8) * 8)     # keep >= ~4 grid steps
    return min(bc, cap_vmem, cap_steps)


def _pick_tb_3d(bc, per_plane_bytes):
    # Leading dim of a 3-D block has no alignment constraint.
    cap_vmem = max(1, _TILE_BUDGET // max(per_plane_bytes, 1))
    cap_steps = max(1, _cdiv(bc, 4))                # keep >= ~4 grid steps
    return max(1, min(bc, cap_vmem, cap_steps))


def _vmem_limit(need_bytes):
    # Explicit scoped-VMEM limit: the double-buffered working set + headroom,
    # clamped to [16 MiB, 48 MiB] so it is legal on every generation.
    return int(min(48 << 20, max(16 << 20, int(need_bytes * 1.25) + (2 << 20))))


# ---------------------------------------------------------------------------
# Wrapper (mirrors AdaptivePadding.forward)
# ---------------------------------------------------------------------------
def adaptive_padding_forward(x, kernel_size=1, stride=1, dilation=1,
                             padding="corner"):
    if padding not in ("same", "corner"):
        raise ValueError("padding must be same or corner")
    kernel_size = to_2tuple(kernel_size)
    stride = to_2tuple(stride)
    dilation = to_2tuple(dilation)

    B, C, H, W = x.shape
    pad_h, pad_w = get_pad_shape((H, W), kernel_size, stride, dilation)
    if pad_h == 0 and pad_w == 0:
        return x                                   # PyTorch returns x unchanged

    if padding == "corner":
        pad_top, pad_left = 0, 0
    else:  # "same"
        pad_top, pad_left = pad_h // 2, pad_w // 2
    pad_bottom = pad_h - pad_top
    pad_right = pad_w - pad_left
    # TODO(synk): only mode='constant' (zero) padding is implemented; the
    # module's `mode` arg ('reflect'/'replicate'/...) has no kernel here.

    H_out, W_out = H + pad_h, W + pad_w
    BC = B * C
    itemsize = jnp.dtype(x.dtype).itemsize
    cost = pl.CostEstimate(
        flops=0, transcendentals=0,
        bytes_accessed=(BC * H * W + BC * H_out * W_out) * itemsize)

    # ---------------- Fast path: no W padding -> lane-dense flat copy -------
    use_flat = (pad_w == 0)
    if use_flat:
        hw_in, hw_out = H * W, H_out * W
        per_plane_flat = (_cdiv(hw_in, 128) + _cdiv(hw_out, 128)) * 128 * itemsize
        if 2 * 8 * per_plane_flat > _HARD_DB_CAP:
            use_flat = False        # huge planes: use the unconstrained 3-D path

    if use_flat:
        tb = _pick_tb_flat(BC, per_plane_flat)
        grid = (_cdiv(BC, tb),)
        need = 2 * tb * per_plane_flat
        kernel = functools.partial(
            _pad_rows_flat_kernel,
            top_elems=pad_top * W, in_elems=hw_in, bottom_elems=pad_bottom * W)
        out = pl.pallas_call(
            kernel,
            out_shape=jax.ShapeDtypeStruct((BC, hw_out), x.dtype),
            grid_spec=pltpu.PrefetchScalarGridSpec(
                num_scalar_prefetch=0,
                grid=grid,
                in_specs=[pl.BlockSpec((tb, hw_in), lambda i: (i, 0))],
                out_specs=pl.BlockSpec((tb, hw_out), lambda i: (i, 0)),
            ),
            compiler_params=pltpu.CompilerParams(
                dimension_semantics=("parallel",),
                vmem_limit_bytes=_vmem_limit(need)),
            cost_estimate=cost,
        )(x.reshape(BC, hw_in))
        return out.reshape(B, C, H_out, W_out)

    # ---------------- General path: W (and maybe H) padding -----------------
    # TODO(synk): planes so large that even one in+out pair exceeds the VMEM
    # budget would need an extra H-tiling level; not needed for Swin inputs.
    in_plane = _cdiv(H, 8) * 8 * _cdiv(W, 128) * 128 * itemsize
    out_plane = _cdiv(H_out, 8) * 8 * _cdiv(W_out, 128) * 128 * itemsize
    tb = _pick_tb_3d(BC, in_plane + out_plane)
    grid = (_cdiv(BC, tb),)
    need = 2 * tb * (in_plane + out_plane)
    kernel = functools.partial(
        _pad_hw_kernel,
        pad_top=pad_top, pad_bottom=pad_bottom,
        pad_left=pad_left, pad_right=pad_right)
    out = pl.pallas_call(
        kernel,
        out_shape=jax.ShapeDtypeStruct((BC, H_out, W_out), x.dtype),
        grid_spec=pltpu.PrefetchScalarGridSpec(
            num_scalar_prefetch=0,
            grid=grid,
            in_specs=[pl.BlockSpec((tb, H, W), lambda i: (i, 0, 0))],
            out_specs=pl.BlockSpec((tb, H_out, W_out), lambda i: (i, 0, 0)),
        ),
        compiler_params=pltpu.CompilerParams(
            dimension_semantics=("parallel",),
            vmem_limit_bytes=_vmem_limit(need)),
        cost_estimate=cost,
    )(x.reshape(BC, H, W))
    return out.reshape(B, C, H_out, W_out)


# ---------------------------------------------------------------------------
# Pure-JAX reference (mirrors the PyTorch forward) for correctness checking
# ---------------------------------------------------------------------------
def adaptive_padding_reference(x, kernel_size=1, stride=1, dilation=1,
                               padding="corner"):
    kernel_size = to_2tuple(kernel_size)
    stride = to_2tuple(stride)
    dilation = to_2tuple(dilation)
    H, W = x.shape[-2:]
    pad_h, pad_w = get_pad_shape((H, W), kernel_size, stride, dilation)
    if pad_h == 0 and pad_w == 0:
        return x
    if padding == "corner":
        pads = ((0, 0), (0, 0), (0, pad_h), (0, pad_w))
    else:  # "same"
        pads = ((0, 0), (0, 0),
                (pad_h // 2, pad_h - pad_h // 2),
                (pad_w // 2, pad_w - pad_w // 2))
    return jnp.pad(x, pads)


# ---------------------------------------------------------------------------
if __name__ == "__main__":
    def check(shape, ksize, stride, dilation, padding, expect_hw):
        x = jax.random.normal(jax.random.PRNGKey(0), shape, jnp.float32)
        out = adaptive_padding_forward(x, ksize, stride, dilation, padding)
        out = jax.block_until_ready(out)
        ref = adaptive_padding_reference(x, ksize, stride, dilation, padding)
        assert out.shape[-2:] == expect_hw, (out.shape, expect_hw)
        np.testing.assert_allclose(np.asarray(out), np.asarray(ref),
                                   rtol=0, atol=0)

    # General path (both H and W padding), docstring example: 15x17 -> 16x32.
    check((2, 4, 15, 17), 16, 16, 1, "corner", (16, 32))
    check((2, 4, 15, 17), 16, 16, 1, "same", (16, 32))
    # General path with a non-zero top pad ("same", pad_h = 2).
    check((2, 4, 14, 17), 16, 16, 1, "same", (16, 32))

    # Lane-dense flat fast path (pad_w == 0): 15x16 -> 16x16.
    check((2, 4, 15, 16), 16, 16, 1, "corner", (16, 16))
    check((2, 4, 14, 16), 16, 16, 1, "same", (16, 16))

    # Ragged last grid block (B*C = 10 is not a multiple of the chosen tile).
    check((2, 5, 15, 17), 16, 16, 1, "corner", (16, 32))

    # No-pad fast path returns the input unchanged.
    x_aligned = jax.random.normal(jax.random.PRNGKey(1), (2, 4, 16, 32),
                                  jnp.float32)
    out_nopad = jax.block_until_ready(
        adaptive_padding_forward(x_aligned, 16, 16, 1, "corner"))
    np.testing.assert_allclose(np.asarray(out_nopad), np.asarray(x_aligned),
                               rtol=0, atol=0)

    print("KERNEL_OK")
</pallas_src>

<mosaic_0001>
module attributes {stable_mosaic.version = 11 : i64} {
  func.func @_pad_hw_kernel(%arg0: i32, %arg1: memref<2x15x17xf32, #tpu.memory_space<vmem>>, %arg2: memref<2x16x32xf32, #tpu.memory_space<vmem>>) attributes {dimension_semantics = [#tpu.dimension_semantics<parallel>], iteration_bounds = array<i64: 4>, scalar_prefetch = 0 : i64, scratch_operands = 0 : i64, tpu.core_type = #tpu.core_type<tc>, window_params = [{transform_indices = @transform_0, window_bounds = array<i64: 2, 15, 17>}, {transform_indices = @transform_1, window_bounds = array<i64: 2, 16, 32>}]} {
    %c0 = arith.constant 0 : index
    %c0_0 = arith.constant 0 : index
    %c0_1 = arith.constant 0 : index
    %0 = vector.load %arg1[%c0, %c0_0, %c0_1] : memref<2x15x17xf32, #tpu.memory_space<vmem>>, vector<2x15x17xf32>
    %c0_2 = arith.constant 0 : index
    %c0_3 = arith.constant 0 : index
    %c0_4 = arith.constant 0 : index
    %1 = vector.load %arg2[%c0_2, %c0_3, %c0_4] : memref<2x16x32xf32, #tpu.memory_space<vmem>>, vector<2x15x17xf32>
    tpu.vector_store %arg2[%c0_2, %c0_3, %c0_4], %0 {strides = array<i32>} : memref<2x16x32xf32, #tpu.memory_space<vmem>>, vector<2x15x17xf32>,
    %cst = arith.constant 0.000000e+00 : f32
    %2 = vector.broadcast %cst : f32 to vector<2x1x32xf32>
    %c0_5 = arith.constant 0 : index
    %c15 = arith.constant 15 : index
    %c0_6 = arith.constant 0 : index
    %3 = vector.load %arg2[%c0_5, %c15, %c0_6] : memref<2x16x32xf32, #tpu.memory_space<vmem>>, vector<2x1x32xf32>
    tpu.vector_store %arg2[%c0_5, %c15, %c0_6], %2 {strides = array<i32>} : memref<2x16x32xf32, #tpu.memory_space<vmem>>, vector<2x1x32xf32>,
    %cst_7 = arith.constant 0.000000e+00 : f32
    %4 = vector.broadcast %cst_7 : f32 to vector<2x15x15xf32>
    %c0_8 = arith.constant 0 : index
    %c0_9 = arith.constant 0 : index
    %c17 = arith.constant 17 : index
    %5 = vector.load %arg2[%c0_8, %c0_9, %c17] : memref<2x16x32xf32, #tpu.memory_space<vmem>>, vector<2x15x15xf32>
    tpu.vector_store %arg2[%c0_8, %c0_9, %c17], %4 {strides = array<i32>} : memref<2x16x32xf32, #tpu.memory_space<vmem>>, vector<2x15x15xf32>,
    return
  }
  func.func @transform_0(%arg0: i32) -> (i32, i32, i32) {
    %c0_i32 = arith.constant 0 : i32
    %c0_i32_0 = arith.constant 0 : i32
    %c0_i32_1 = arith.constant 0 : i32
    return %arg0, %c0_i32, %c0_i32_0 : i32, i32, i32
  }
  func.func @transform_1(%arg0: i32) -> (i32, i32, i32) {
    %c0_i32 = arith.constant 0 : i32
    %c0_i32_0 = arith.constant 0 : i32
    %c0_i32_1 = arith.constant 0 : i32
    return %arg0, %c0_i32, %c0_i32_0 : i32, i32, i32
  }
}

</mosaic_0001>

<llo_original>
// kernel: tpu_custom_call.1
$region0: #{tpu_custom_call.1}
  #allocation0 [shape = 'u32[]', space=smem, size = 0x4, offset = 0x4, fixed_abs, tag = 'smem constant byte address 0x4 - core index']
  #allocation1 [shape = 'u32[144,128]{1,0:T(1,128)}', space=vmem, size = 0x12000, scoped, tag = 'internal scratch']
  %s0 = inlined_call_operand.vmem [shape: f32[8,15,17], index: 0, kind: input, shape index: {}]
  %s1 = inlined_call_operand.hbm [shape: f32[8,16,32], index: 1, kind: output, shape index: {}]
  %s2 = sld [smem:[#allocation0]]
  $region37: #{tpu_custom_call.1} parent=0
    _
  %s4 = ssub.s32 1, %s2
  %s5 = scalar_select 0, %s4, %s2
  $region1: #{tpu_custom_call.1} parent=0
    #allocation2 [shape = 'u8[32768]{0}', space=vmem, size = 0x8000, scoped, tag = 'output window, operand 0']
    #allocation3 [shape = 's32[2]{0}', space=sflag, size = 0x8, scoped, tag = 'scoped memory for tpu_custom_call.1']
    %6 = vsyncpa [#allocation3], 0
    %s7 = scalar_lea.sflag [#allocation3], 1
    %8 = vsyncpa %s7, 0
    loop: start=0, step=1, limit=6
    $region2: #{tpu_custom_call.1} parent=1 // loop_pre_header
      _
    $region3: #{tpu_custom_call.1} parent=1 // loop_header
      %s10 = sphi 0, %s14
      %p11 = scmp.ge.s32.totalorder %s10, 6
      %s20 = sphi 0, %s22
      %s23 = sphi 0, %s20
      %s24 = sphi 0, %s23
      %s40 = sphi 0, %s24
      %s46 = sphi 0, %s48
      %s49 = sphi 0, %s46
      %s50 = sphi 0, %s49
      %s66 = sphi 0, %s50
    $region4: #{tpu_custom_call.1} parent=1 // loop_header_branch
      %13 = sbr.rel (%p11) target = $region8
    $region5: #{tpu_custom_call.1} parent=1 // loop_body
      %s15 = ssub.s32 %s10, 1
      %s16 = ssub.s32 %s10, 2
      %s17 = sadd.s32 %s10, 1
      %s18 = ssub.s32 %s10, %s17
      %p19 = scmp.eq.s32.totalorder %s18, 0
      %s21 = sadd.s32 %s20, 1
      %s22 = scalar_select %p19, %s20, %s21
      %p25 = pneg %p19
      %p26 = scmp.eq.s32.totalorder %s10, 3
      %p27 = por %p25, %p26
      %p28 = scmp.ne.s32.totalorder %s20, %s23
      %p29 = scmp.eq.s32.totalorder %s10, 0
      %p30 = por %p28, %p29
      %p31 = scmp.ne.s32.totalorder %s20, %s23
      %p32 = scmp.eq.s32.totalorder %s15, 3
      %p33 = por %p31, %p32
      %p34 = scmp.ne.s32.totalorder %s23, %s24
      %p35 = scmp.eq.s32.totalorder %s15, 0
      %p36 = por %p34, %p35
      %p37 = scmp.ne.s32.totalorder %s23, %s24
      %p38 = scmp.eq.s32.totalorder %s16, 3
      %p39 = por %p37, %p38
      %p41 = scmp.ne.s32.totalorder %s24, %s40
      %p42 = scmp.eq.s32.totalorder %s16, 0
      %p43 = por %p41, %p42
      %s44 = ssub.s32 %s10, %s17
      %p45 = scmp.eq.s32.totalorder %s44, 0
      %s47 = sadd.s32 %s46, 1
      %s48 = scalar_select %p45, %s46, %s47
      %p51 = pneg %p45
      %p52 = scmp.eq.s32.totalorder %s10, 3
      %p53 = por %p51, %p52
      %p54 = scmp.ne.s32.totalorder %s46, %s49
      %p55 = scmp.eq.s32.totalorder %s10, 0
      %p56 = por %p54, %p55
      %p57 = scmp.ne.s32.totalorder %s46, %s49
      %p58 = scmp.eq.s32.totalorder %s15, 3
      %p59 = por %p57, %p58
      %p60 = scmp.ne.s32.totalorder %s49, %s50
      %p61 = scmp.eq.s32.totalorder %s15, 0
      %p62 = por %p60, %p61
      %p63 = scmp.ne.s32.totalorder %s49, %s50
      %p64 = scmp.eq.s32.totalorder %s16, 3
      %p65 = por %p63, %p64
      %p67 = scmp.ne.s32.totalorder %s50, %s66
      %p68 = scmp.eq.s32.totalorder %s16, 0
      %p69 = por %p67, %p68
      %p70 = scmp.le.s32.totalorder 1, %s10
      %p71 = scmp.lt.s32.totalorder %s10, 5
      %p72 = pnand %p70, %p71
      %p73 = pneg %p72
      // Predicated region
      $region9: #{tpu_custom_call.1} parent=5 // pred_check
        _
      $region10: #{tpu_custom_call.1} parent=5 // pred_check_branch
        %75 = sbr.rel (%p72) target = $region12
      $region11: #{tpu_custom_call.1} parent=5 // pred_region
        %s76 = ssub.s32 %s10, 1
      $region12: #{tpu_custom_call.1} parent=5 // pred_fallthru
        _
      %p77 = scmp.lt.s32.totalorder %s10, 4
      // Predicated region
      $region13: #{tpu_custom_call.1} parent=5 // pred_check
        %p78 = pneg %p77
      $region14: #{tpu_custom_call.1} parent=5 // pred_check_branch
        %80 = sbr.rel (%p78) target = $region16
      $region15: #{tpu_custom_call.1} parent=5 // pred_region
        // Predicated region
        $region17: #{tpu_custom_call.1} parent=15 // pred_check
          %p81 = pneg %p30
        $region18: #{tpu_custom_call.1} parent=15 // pred_check_branch
          %83 = sbr.rel (%p81) target = $region20
        $region19: #{tpu_custom_call.1} parent=15 // pred_region
          %s84 = smul.u32 2, %s10
          %p85 = scmp.lt.s32.totalorder %s84, 7
          %s86 = scalar_select %p85, %s84, 7
          %s87 = smul.addr %s86, 2
          %s88 = smul.addr %s87, 8
          %s89 = scalar_lea.vmem %s0, %s88
          %s90 = smul.u32 2, %s10
        $region20: #{tpu_custom_call.1} parent=15 // pred_fallthru
          _
      $region16: #{tpu_custom_call.1} parent=5 // pred_fallthru
        _
      %p91 = scmp.le.s32.totalorder 1, %s10
      %p92 = scmp.lt.s32.totalorder %s10, 5
      %p93 = pnand %p91, %p92
      %p94 = pneg %p93
      // Predicated region
      $region21: #{tpu_custom_call.1} parent=5 // pred_check
        _
      $region22: #{tpu_custom_call.1} parent=5 // pred_check_branch
        %96 = sbr.rel (%p93) target = $region24
      $region23: #{tpu_custom_call.1} parent=5 // pred_region
        %s97 = ssub.s32 %s10, 1
        %s98 = smul.u32 2, %s15
        %p99 = scmp.lt.s32.totalorder %s98, 7
        %s100 = scalar_select %p99, %s98, 7
        %s101 = smul.addr %s100, 2
        %s102 = smul.addr %s101, 8
        %s103 = scalar_lea.vmem %s0, %s102
        %p104 = pneg %p36
        %p105 = pneg %p33
        %p106 = pneg %p62
        %p107 = pneg %p59
        %s108 = sand.u32 %s49, 1
        %s109 = scalar_lea.sflag [#allocation3], %s108
        %s110 = sand.u32 %s49, 1
        %s111 = smul.addr %s110, 32
        %s112 = scalar_lea.vmem [#allocation2], %s111
        %s113 = smul.u32 2, %s15
        %p114 = scmp.lt.s32.totalorder %s113, 7
        %s115 = scalar_select %p114, %s113, 7
        %s116 = smul.addr %s115, 2
        %s117 = smul.addr %s116, 8
        %s118 = scalar_lea.vmem %s0, %s117
        %s119 = smul.u32 2, %s15
        %s120 = smul.u32 2, %s15
        %v121 = vld [vmem:[%s118] sm:$0xff]
        %v122 = vld [vmem:[%s118 + $0x8] sm:$0x7f]
        %v123 = vld [vmem:[%s118 + $0x10] sm:$0xff]
        %v124 = vld [vmem:[%s118 + $0x18] sm:$0x7f]
        %vm125 = vcmask 138240
        %126 = vst.msk [vmem:[%s112] sm:$0xff] %vm125, %v121
        %vm127 = vcmask 137216
        %128 = vst.msk [vmem:[%s112 + $0x8] sm:$0x7f] %vm127, %v122
        %129 = vst.msk [vmem:[%s112 + $0x10] sm:$0xff] %vm125, %v123
        %130 = vst.msk [vmem:[%s112 + $0x18] sm:$0x7f] %vm127, %v124
        %vm131 = vcmask 253952
        %132 = vst.msk [vmem:[%s112 + $0xf] sm:$0x1] %vm131, 0.0
        %133 = vst.msk [vmem:[%s112 + $0x1f] sm:$0x1] %vm131, 0.0
        %vm134 = vcmask 261256
        %135 = vst.msk [vmem:[%s112] sm:$0xff] %vm134, 0.0
        %vm136 = vcmask 260232
        %137 = vst.msk [vmem:[%s112 + $0x8] sm:$0x7f] %vm136, 0.0
        %138 = vst.msk [vmem:[%s112 + $0x10] sm:$0xff] %vm134, 0.0
        %139 = vst.msk [vmem:[%s112 + $0x18] sm:$0x7f] %vm136, 0.0
        %s140 = sand.u32 %s49, 1
        %s141 = scalar_lea.sflag [#allocation3], %s140
        %s142 = sand.u32 %s49, 1
        %s143 = smul.addr %s142, 32
        %s144 = scalar_lea.vmem [#allocation2], %s143
        // Predicated region
        $region25: #{tpu_custom_call.1} parent=23 // pred_check
          %p145 = pneg %p59
        $region26: #{tpu_custom_call.1} parent=23 // pred_check_branch
          %147 = sbr.rel (%p145) target = $region28
        $region27: #{tpu_custom_call.1} parent=23 // pred_region
          %s148 = smul.u32 2, %s15
          %s150 = ssub.s32 512, 512
          %151 = vsyncadd %s141, %s150
          %s152 = smul.addr %s148, 2
          %s153 = smul.addr %s152, 128
          %s154 = scalar_lea.hbm %s1, %s153
          %s155 = sshll.u32 %s144, 4
          %s156 = int_to_ptr.vmem [resolvable:$true] %s155
          %161 = dma.vmem_to_hbm [thread:$0]  %s156, 512, %s154, %s141, 128, 128, 8
        $region28: #{tpu_custom_call.1} parent=23 // pred_fallthru
          _
      $region24: #{tpu_custom_call.1} parent=5 // pred_fallthru
        _
      %p162 = scmp.le.s32.totalorder 2, %s10
      // Predicated region
      $region29: #{tpu_custom_call.1} parent=5 // pred_check
        %p163 = pneg %p162
      $region30: #{tpu_custom_call.1} parent=5 // pred_check_branch
        %165 = sbr.rel (%p163) target = $region32
      $region31: #{tpu_custom_call.1} parent=5 // pred_region
        %s166 = ssub.s32 %s10, 2
        // Predicated region
        $region33: #{tpu_custom_call.1} parent=31 // pred_check
          %p167 = pneg %p65
        $region34: #{tpu_custom_call.1} parent=31 // pred_check_branch
          %169 = sbr.rel (%p167) target = $region36
        $region35: #{tpu_custom_call.1} parent=31 // pred_region
          %s170 = sand.u32 %s50, 1
          %s171 = scalar_lea.sflag [#allocation3], %s170
          %s172 = sand.u32 %s50, 1
          %s173 = smul.addr %s172, 32
          %s174 = scalar_lea.vmem [#allocation2], %s173
          %175 = dma.done %s171, 512
        $region36: #{tpu_custom_call.1} parent=31 // pred_fallthru
          _
      $region32: #{tpu_custom_call.1} parent=5 // pred_fallthru
        _
    $region6: #{tpu_custom_call.1} parent=1 // loop_footer
      %s14 = sadd.s32 1, %s10
    $region7: #{tpu_custom_call.1} parent=1 // loop_footer_branch
      %9 = sbr.rel target = $region3
    $region8: #{tpu_custom_call.1} parent=1 // loop_exit
      _
    %176 = vsyncpa [#allocation3], 1
    %s177 = scalar_lea.sflag [#allocation3], 1
    %178 = vsyncpa %s177, 1

</llo_original>
